<compile_context>
chip_gen: v5e
topology: v5e:2x2
jax: 0.10.0
libtpu: 0.0.40
codegen_flags: <defaults>
</compile_context>

<pallas_src>
import functools
import inspect

import jax
import jax.numpy as jnp
from jax.experimental import pallas as pl
from jax.experimental.pallas import tpu as pltpu


def _round_up(x, m):
    return (x + m - 1) // m * m


def _general_layer_kernel(x_ref, w_ref, b_ref, *rest,
                          dropout_p, keep_threshold, has_act, has_l2norm):
    # rest = ([mask_ref,] o_ref, acc_ref)
    if dropout_p > 0.0:
        mask_ref, o_ref, acc_ref = rest
    else:
        o_ref, acc_ref = rest

    k = pl.program_id(2)

    @pl.when(k == 0)
    def _():
        acc_ref[...] = jnp.zeros_like(acc_ref)

    # MXU matmul: x cast to the (possibly bf16) weight dtype, f32 accumulation.
    x = x_ref[...].astype(w_ref.dtype)
    acc_ref[...] += jnp.dot(x, w_ref[...], preferred_element_type=jnp.float32)

    @pl.when(k == pl.num_programs(2) - 1)
    def _():
        y = acc_ref[...] + b_ref[...].astype(jnp.float32)

        if dropout_p > 0.0:
            # Integer-domain keep test: P(keep) = 1 - p (bits are uniform uint32).
            thr = jnp.asarray(keep_threshold, dtype=jnp.uint32)
            keep = mask_ref[...] >= thr
            y = jnp.where(keep, y, 0.0) * jnp.float32(1.0 / (1.0 - dropout_p))

        if has_act:
            y = jnp.maximum(y, 0.0)

        if has_l2norm:
            # F.normalize(p=2, dim=1), eps=1e-12, via EUP rsqrt:
            # y / max(||y||, 1e-12) == y * rsqrt(max(sum(y^2), 1e-24)).
            sumsq = jnp.sum(y * y, axis=-1, keepdims=True)
            y = y * jax.lax.rsqrt(jnp.maximum(sumsq, jnp.float32(1e-24)))

        o_ref[...] = y.astype(o_ref.dtype)


def general_layer(x, w, b, *, dropout_p=0.2, dropout_bits=None, rng_key=None,
                  has_act=True, has_l2norm=False, bf16_matmul=True, tile_n=None):
    """GeneralLayer forward.

    x: (N, dim_in) float32.
    w: (dim_out, dim_in)  -- PyTorch nn.Linear weight layout.
    b: (dim_out,)
    dropout_bits: optional uint32 (N, dim_out) random bits; if None and
      dropout_p > 0, they are generated from rng_key.  Set dropout_p=0.0 for eval.
    """
    n, dim_in = x.shape
    dim_out = w.shape[0]
    assert w.shape == (dim_out, dim_in) and b.shape == (dim_out,)

    # ---------------- tile selection ----------------
    if tile_n is None:
        tile_n = _round_up(n, 8) if n < 512 else 512        # real row tile
    tile_n = _round_up(tile_n, 8)
    n_pad = _round_up(n, tile_n)

    dout_128 = _round_up(dim_out, 128)                       # lane-dense output
    # L2 norm reduces over the full feature dim -> keep dim_out in one block then.
    tile_dout = dout_128 if has_l2norm else min(dout_128, 512)
    dout_pad = _round_up(dim_out, tile_dout)

    if dim_in > 1024 and dim_in % 512 == 0:                  # K tiling for large dim_in
        tile_k = 512
    else:
        tile_k = dim_in
    num_k = dim_in // tile_k

    grid = (n_pad // tile_n, dout_pad // tile_dout, num_k)

    # ---------------- host-side prep (padding / dtypes) ----------------
    x_p = x if n_pad == n else jnp.pad(x, ((0, n_pad - n), (0, 0)))
    w_t = jnp.transpose(w)                                   # (dim_in, dim_out)
    if dout_pad != dim_out:
        w_t = jnp.pad(w_t, ((0, 0), (0, dout_pad - dim_out)))
        b_p = jnp.pad(b, (0, dout_pad - dim_out))
    else:
        b_p = b
    b_p = b_p.reshape(1, dout_pad).astype(jnp.float32)
    if bf16_matmul:
        w_t = w_t.astype(jnp.bfloat16)

    inputs = [x_p, w_t, b_p]
    in_specs = [
        pl.BlockSpec((tile_n, tile_k), lambda i, j, k: (i, k)),
        pl.BlockSpec((tile_k, tile_dout), lambda i, j, k: (k, j)),
        pl.BlockSpec((1, tile_dout), lambda i, j, k: (0, j)),
    ]

    keep_threshold = 0
    if dropout_p > 0.0:
        keep_threshold = min(int(dropout_p * (2 ** 32)), 2 ** 32 - 1)
        if dropout_bits is None:
            if rng_key is None:
                raise ValueError("dropout_p > 0 requires rng_key or dropout_bits")
            dropout_bits = jax.random.bits(rng_key, (n, dim_out), dtype=jnp.uint32)
        bits = dropout_bits
        if bits.shape != (n_pad, dout_pad):
            bits = jnp.pad(bits, ((0, n_pad - n), (0, dout_pad - dim_out)))
        inputs.append(bits)
        in_specs.append(pl.BlockSpec((tile_n, tile_dout), lambda i, j, k: (i, j)))

    out_shape = jax.ShapeDtypeStruct((n_pad, dout_pad), x.dtype)
    out_spec = pl.BlockSpec((tile_n, tile_dout), lambda i, j, k: (i, j))

    kernel = functools.partial(_general_layer_kernel,
                               dropout_p=float(dropout_p),
                               keep_threshold=keep_threshold,
                               has_act=has_act, has_l2norm=has_l2norm)

    # VMEM budget: double-buffered x/w/b/mask/out tiles + f32 accumulator scratch.
    w_bytes = 2 if bf16_matmul else 4
    vmem_need = (2 * tile_n * tile_k * x.dtype.itemsize
                 + 2 * tile_k * tile_dout * w_bytes
                 + 2 * tile_dout * 4
                 + 2 * tile_n * tile_dout * x.dtype.itemsize
                 + (2 * tile_n * tile_dout * 4 if dropout_p > 0.0 else 0)
                 + tile_n * tile_dout * 4)
    vmem_limit = int(min(max(vmem_need * 5 // 4, 16 * 1024 * 1024), 64 * 1024 * 1024))

    grid_spec = pltpu.PrefetchScalarGridSpec(
        num_scalar_prefetch=0,
        grid=grid,
        in_specs=in_specs,
        out_specs=out_spec,
        scratch_shapes=[pltpu.VMEM((tile_n, tile_dout), jnp.float32)],
    )

    call_kwargs = dict(
        out_shape=out_shape,
        grid_spec=grid_spec,
        compiler_params=pltpu.CompilerParams(
            dimension_semantics=("parallel", "parallel", "arbitrary"),
            vmem_limit_bytes=vmem_limit),
    )
    # Advisory cost estimate (skip gracefully on JAX versions without the kwarg).
    cost = pl.CostEstimate(
        flops=2 * n_pad * dim_in * dout_pad,
        transcendentals=n_pad if has_l2norm else 0,
        bytes_accessed=int(sum(a.size * a.dtype.itemsize for a in inputs)
                           + n_pad * dout_pad * x.dtype.itemsize),
    )
    try:
        if "cost_estimate" in inspect.signature(pl.pallas_call).parameters:
            call_kwargs["cost_estimate"] = cost
    except (TypeError, ValueError):
        pass

    out = pl.pallas_call(kernel, **call_kwargs)(*inputs)
    return out[:n, :dim_out]


if __name__ == "__main__":
    key = jax.random.PRNGKey(0)
    kx, kw, kb, kd, kx2, kw2, kb2 = jax.random.split(key, 7)

    # Small shapes consistent with the module: N nodes, dim_in -> dim_out.
    N, DIM_IN, DIM_OUT = 8, 32, 16
    x = jax.random.normal(kx, (N, DIM_IN), dtype=jnp.float32)
    bound = 1.0 / (DIM_IN ** 0.5)
    w = jax.random.uniform(kw, (DIM_OUT, DIM_IN), jnp.float32, -bound, bound)
    b = jax.random.uniform(kb, (DIM_OUT,), jnp.float32, -bound, bound)
    bits = jax.random.bits(kd, (N, DIM_OUT), dtype=jnp.uint32)

    def ref_forward(x, w, b, bits, p, has_act, has_l2norm):
        y = jnp.dot(x, w.T, precision=jax.lax.Precision.HIGHEST) + b
        if p > 0.0:
            thr = jnp.uint32(min(int(p * 2 ** 32), 2 ** 32 - 1))
            y = jnp.where(bits >= thr, y, 0.0) / (1.0 - p)
        if has_act:
            y = jnp.maximum(y, 0.0)
        if has_l2norm:
            nrm = jnp.sqrt(jnp.sum(y * y, axis=1, keepdims=True))
            y = y / jnp.maximum(nrm, 1e-12)
        return y

    # 1) Dropout off, f32 matmul: match reference on both l2norm settings.
    for l2 in (False, True):
        out = general_layer(x, w, b, dropout_p=0.0, has_act=True,
                            has_l2norm=l2, bf16_matmul=False)
        ref = ref_forward(x, w, b, None, 0.0, True, l2)
        assert jnp.allclose(out, ref, atol=1e-2, rtol=1e-2), f"mismatch l2={l2}"

    # 2) Train-mode dropout with shared host-generated bits: exact mask reproduction.
    out = general_layer(x, w, b, dropout_p=0.2, dropout_bits=bits,
                        has_act=True, has_l2norm=False, bf16_matmul=False)
    ref = ref_forward(x, w, b, bits, 0.2, True, False)
    assert jnp.allclose(out, ref, atol=1e-2, rtol=1e-2), "dropout mismatch"

    # 3) Default fast path: bf16 MXU inputs + dropout + ReLU (loose tol for bf16).
    out = general_layer(x, w, b, dropout_p=0.2, dropout_bits=bits,
                        has_act=True, has_l2norm=False, bf16_matmul=True)
    assert jnp.allclose(out, ref, atol=5e-2, rtol=5e-2), "bf16 path mismatch"
    out_l2 = general_layer(x, w, b, dropout_p=0.2, rng_key=kd,
                           has_act=True, has_l2norm=True, bf16_matmul=True)
    jax.block_until_ready(out_l2)

    # 4) Multi-tile grid: row tiling + N / dim_out padding and slicing.
    N2, DIN2, DOUT2 = 300, 64, 40
    x2 = jax.random.normal(kx2, (N2, DIN2), dtype=jnp.float32)
    bnd2 = 1.0 / (DIN2 ** 0.5)
    w2 = jax.random.uniform(kw2, (DOUT2, DIN2), jnp.float32, -bnd2, bnd2)
    b2 = jax.random.uniform(kb2, (DOUT2,), jnp.float32, -bnd2, bnd2)
    out2 = general_layer(x2, w2, b2, dropout_p=0.0, has_act=True,
                         has_l2norm=False, bf16_matmul=False, tile_n=128)
    ref2 = ref_forward(x2, w2, b2, None, 0.0, True, False)
    assert jnp.allclose(out2, ref2, atol=1e-2, rtol=1e-2), "tiled-grid mismatch"

    jax.block_until_ready(out)
    print("KERNEL_OK")
</pallas_src>

<mosaic_0001>
module attributes {stable_mosaic.version = 11 : i64} {
  func.func @_general_layer_kernel(%arg0: i32, %arg1: i32, %arg2: i32, %arg3: memref<8x32xf32, #tpu.memory_space<vmem>>, %arg4: memref<32x128xf32, #tpu.memory_space<vmem>>, %arg5: memref<1x128xf32, #tpu.memory_space<vmem>>, %arg6: memref<8x128xf32, #tpu.memory_space<vmem>>, %arg7: memref<8x128xf32, #tpu.memory_space<vmem>>) attributes {dimension_semantics = [#tpu.dimension_semantics<parallel>, #tpu.dimension_semantics<parallel>, #tpu.dimension_semantics<arbitrary>], iteration_bounds = array<i64: 1, 1, 1>, scalar_prefetch = 0 : i64, scratch_operands = 1 : i64, tpu.core_type = #tpu.core_type<tc>, window_params = [{transform_indices = @transform_0, window_bounds = array<i64: 8, 32>}, {transform_indices = @transform_1, window_bounds = array<i64: 32, 128>}, {transform_indices = @transform_2, window_bounds = array<i64: 1, 128>}, {transform_indices = @transform_3, window_bounds = array<i64: 8, 128>}]} {
    %c0_i32 = arith.constant 0 : i32
    %0 = arith.cmpi eq, %arg2, %c0_i32 : i32
    %1 = arith.extui %0 : i1 to i32
    %c0_i32_0 = arith.constant 0 : i32
    %2 = arith.cmpi ne, %1, %c0_i32_0 : i32
    scf.if %2 {
      %cst_10 = arith.constant 0.000000e+00 : f32
      %12 = vector.broadcast %cst_10 : f32 to vector<8x128xf32>
      %c0_11 = arith.constant 0 : index
      %c0_12 = arith.constant 0 : index
      %13 = vector.load %arg7[%c0_11, %c0_12] : memref<8x128xf32, #tpu.memory_space<vmem>>, vector<8x128xf32>
      tpu.vector_store %arg7[%c0_11, %c0_12], %12 {strides = array<i32>} : memref<8x128xf32, #tpu.memory_space<vmem>>, vector<8x128xf32>,
    } else {
    }
    %c0 = arith.constant 0 : index
    %c0_1 = arith.constant 0 : index
    %3 = vector.load %arg3[%c0, %c0_1] : memref<8x32xf32, #tpu.memory_space<vmem>>, vector<8x32xf32>
    %c0_2 = arith.constant 0 : index
    %c0_3 = arith.constant 0 : index
    %4 = vector.load %arg7[%c0_2, %c0_3] : memref<8x128xf32, #tpu.memory_space<vmem>>, vector<8x128xf32>
    %c0_4 = arith.constant 0 : index
    %c0_5 = arith.constant 0 : index
    %5 = vector.load %arg4[%c0_4, %c0_5] : memref<32x128xf32, #tpu.memory_space<vmem>>, vector<32x128xf32>
    %cst = arith.constant dense<0.000000e+00> : vector<8x128xf32>
    %6 = tpu.matmul %3, %5, %cst {dimension_numbers = #tpu.dot_dimension_numbers<[1], [0], [0], [1], [0, 0, 1, 1], [], []>} : vector<8x32xf32>, vector<32x128xf32>, vector<8x128xf32> -> vector<8x128xf32>
    %7 = arith.addf %4, %6 : vector<8x128xf32>
    %c0_6 = arith.constant 0 : index
    %c0_7 = arith.constant 0 : index
    %8 = vector.load %arg7[%c0_6, %c0_7] : memref<8x128xf32, #tpu.memory_space<vmem>>, vector<8x128xf32>
    tpu.vector_store %arg7[%c0_6, %c0_7], %7 {strides = array<i32>} : memref<8x128xf32, #tpu.memory_space<vmem>>, vector<8x128xf32>,
    %c0_i32_8 = arith.constant 0 : i32
    %9 = arith.cmpi eq, %arg2, %c0_i32_8 : i32
    %10 = arith.extui %9 : i1 to i32
    %c0_i32_9 = arith.constant 0 : i32
    %11 = arith.cmpi ne, %10, %c0_i32_9 : i32
    scf.if %11 {
      %c0_10 = arith.constant 0 : index
      %c0_11 = arith.constant 0 : index
      %12 = vector.load %arg7[%c0_10, %c0_11] : memref<8x128xf32, #tpu.memory_space<vmem>>, vector<8x128xf32>
      %c0_12 = arith.constant 0 : index
      %c0_13 = arith.constant 0 : index
      %13 = vector.load %arg5[%c0_12, %c0_13] : memref<1x128xf32, #tpu.memory_space<vmem>>, vector<1x128xf32>
      %14 = vector.broadcast %13 : vector<1x128xf32> to vector<8x128xf32>
      %15 = arith.addf %12, %14 : vector<8x128xf32>
      %cst_14 = arith.constant 0.000000e+00 : f32
      %16 = vector.broadcast %cst_14 : f32 to vector<8x128xf32>
      %17 = arith.maximumf %15, %16 : vector<8x128xf32>
      %c0_15 = arith.constant 0 : index
      %c0_16 = arith.constant 0 : index
      %18 = vector.load %arg6[%c0_15, %c0_16] : memref<8x128xf32, #tpu.memory_space<vmem>>, vector<8x128xf32>
      tpu.vector_store %arg6[%c0_15, %c0_16], %17 {strides = array<i32>} : memref<8x128xf32, #tpu.memory_space<vmem>>, vector<8x128xf32>,
    } else {
    }
    return
  }
  func.func @transform_0(%arg0: i32, %arg1: i32, %arg2: i32) -> (i32, i32) {
    %c0_i32 = arith.constant 0 : i32
    return %arg0, %arg2 : i32, i32
  }
  func.func @transform_1(%arg0: i32, %arg1: i32, %arg2: i32) -> (i32, i32) {
    %c0_i32 = arith.constant 0 : i32
    return %arg2, %arg1 : i32, i32
  }
  func.func @transform_2(%arg0: i32, %arg1: i32, %arg2: i32) -> (i32, i32) {
    %c0_i32 = arith.constant 0 : i32
    %c0_i32_0 = arith.constant 0 : i32
    return %c0_i32, %arg1 : i32, i32
  }
  func.func @transform_3(%arg0: i32, %arg1: i32, %arg2: i32) -> (i32, i32) {
    %c0_i32 = arith.constant 0 : i32
    return %arg0, %arg1 : i32, i32
  }
}

</mosaic_0001>

<llo_original>
// kernel: tpu_custom_call.1
$region0: #{tpu_custom_call.1}
  #allocation0 [shape = 'u32[]', space=smem, size = 0x4, offset = 0x4, fixed_abs, tag = 'smem constant byte address 0x4 - core index']
  #allocation1 [shape = 'u32[72,128]{1,0:T(1,128)}', space=vmem, size = 0x9000, scoped, tag = 'internal scratch']
  #allocation2 [shape = 'f32[8,128]{1,0:T(8,128)}', space=vmem, size = 0x1000, scoped, tag = 'scratch operand']
  %s0 = inlined_call_operand.hbm [shape: f32[8,32], index: 0, kind: input, shape index: {}]
  %s1 = inlined_call_operand.hbm [shape: f32[32,128], index: 1, kind: input, shape index: {}]
  %s2 = inlined_call_operand.vmem [shape: f32[1,128], index: 2, kind: input, shape index: {}]
  %s3 = inlined_call_operand.hbm [shape: f32[8,128], index: 3, kind: output, shape index: {}]
  %s4 = sld [smem:[#allocation0]]
  $region38: #{tpu_custom_call.1} parent=0
    _
  %s6 = ssub.s32 1, %s4
  %s7 = scalar_select 0, %s6, %s4
  $region1: #{tpu_custom_call.1} parent=0
    #allocation3 [shape = 'u8[4096]{0}', space=vmem, size = 0x1000, scoped, tag = 'input window, operand 0, single buffered']
    #allocation4 [shape = 's32[1]{0}', space=sflag, size = 0x4, scoped, tag = 'scoped memory for tpu_custom_call.1']
    #allocation5 [shape = 's32[1]{0}', space=sflag, size = 0x4, scoped, tag = 'scoped memory for tpu_custom_call.1']
    #allocation6 [shape = 'u8[16384]{0}', space=vmem, size = 0x4000, scoped, tag = 'input window, operand 1, single buffered']
    #allocation7 [shape = 's32[1]{0}', space=sflag, size = 0x4, scoped, tag = 'scoped memory for tpu_custom_call.1']
    #allocation8 [shape = 'u8[4096]{0}', space=vmem, size = 0x1000, scoped, tag = 'output window, operand 0, single buffered']
    %8 = vsyncpa [#allocation4], 0
    %9 = vsyncpa [#allocation7], 0
    %10 = vsyncpa [#allocation5], 0
    // Predicated region
    $region2: #{tpu_custom_call.1} parent=1 // pred_check
      _
    $region3: #{tpu_custom_call.1} parent=1 // pred_check_branch
      %12 = sbr.rel (0) target = $region5
    $region4: #{tpu_custom_call.1} parent=1 // pred_region
      %14 = vsyncadd [#allocation4], 0
      %s16 = sshll.u32 %s0, 4
      %s17 = int_to_ptr.hbm [resolvable:$true] %s16
      %s18 = sshll.u32 [#allocation3], 4
      %s19 = int_to_ptr.vmem [resolvable:$true] %s18
      %21 = dma.hbm_to_vmem [thread:$0]  %s17, 128, %s19, [#allocation4]
    $region5: #{tpu_custom_call.1} parent=1 // pred_fallthru
      _
    // Predicated region
    $region6: #{tpu_custom_call.1} parent=1 // pred_check
      _
    $region7: #{tpu_custom_call.1} parent=1 // pred_check_branch
      %23 = sbr.rel (0) target = $region9
    $region8: #{tpu_custom_call.1} parent=1 // pred_region
      %25 = vsyncadd [#allocation7], 0
      %s26 = sshll.u32 %s1, 4
      %s27 = int_to_ptr.hbm [resolvable:$true] %s26
      %s28 = sshll.u32 [#allocation6], 4
      %s29 = int_to_ptr.vmem [resolvable:$true] %s28
      %34 = dma.hbm_to_vmem [thread:$0]  %s27, 512, %s29, [#allocation7], 128, 128, 8
    $region9: #{tpu_custom_call.1} parent=1 // pred_fallthru
      _
    // Predicated region
    $region10: #{tpu_custom_call.1} parent=1 // pred_check
      _
    $region11: #{tpu_custom_call.1} parent=1 // pred_check_branch
      %36 = sbr.rel (0) target = $region13
    $region12: #{tpu_custom_call.1} parent=1 // pred_region
      _
    $region13: #{tpu_custom_call.1} parent=1 // pred_fallthru
      _
    // Predicated region
    $region14: #{tpu_custom_call.1} parent=1 // pred_check
      _
    $region15: #{tpu_custom_call.1} parent=1 // pred_check_branch
      %38 = sbr.rel (0) target = $region17
    $region16: #{tpu_custom_call.1} parent=1 // pred_region
      %40 = dma.done [#allocation4], 128
    $region17: #{tpu_custom_call.1} parent=1 // pred_fallthru
      _
    // Predicated region
    $region18: #{tpu_custom_call.1} parent=1 // pred_check
      _
    $region19: #{tpu_custom_call.1} parent=1 // pred_check_branch
      %42 = sbr.rel (0) target = $region21
    $region20: #{tpu_custom_call.1} parent=1 // pred_region
      %44 = dma.done [#allocation7], 512
    $region21: #{tpu_custom_call.1} parent=1 // pred_fallthru
      _
    %p45 = scmp.eq.s32.totalorder 0, 0
    // Predicated region
    $region22: #{tpu_custom_call.1} parent=1 // pred_check
      %p46 = pneg %p45
    $region23: #{tpu_custom_call.1} parent=1 // pred_check_branch
      %48 = sbr.rel (%p46) target = $region25
    $region24: #{tpu_custom_call.1} parent=1 // pred_region
      %49 = vst [vmem:[#allocation2] sm:$0xff] 0.0
    $region25: #{tpu_custom_call.1} parent=1 // pred_fallthru
      _
    %v50 = vld [vmem:[#allocation3] sm:$0xff]
    %v51 = vld [vmem:[#allocation2] sm:$0xff]
    %v52 = vld [vmem:[#allocation6] sm:$0xff]
    %v53 = vld [vmem:[#allocation6 + $0x8] sm:$0xff]
    %v54 = vld [vmem:[#allocation6 + $0x10] sm:$0xff]
    %v55 = vld [vmem:[#allocation6 + $0x18] sm:$0xff]
    %vm56 = vcmask 261120
    %v58 = vsel %vm56, %v50, 0
    %60 = vmatpush.msra.mxu0 0.0
    %61 = vmatpush.msra.mxu0 0.0
    %62 = vmatpush.msra.mxu0 0.0
    %63 = vmatpush.msra.mxu0 0.0
    %64 = vmatpush.msra.mxu0 0.0
    %65 = vmatpush.msra.mxu0 0.0
    %66 = vmatpush.msra.mxu0 0.0
    %67 = vmatpush.msra.mxu0 0.0
    %68 = vmatpush.msra.mxu0 0.0
    %69 = vmatpush.msra.mxu0 0.0
    %70 = vmatpush.msra.mxu0 0.0
    %71 = vmatpush.msra.mxu0 0.0
    %72 = vmatpush.msra.mxu0 %v55
    %73 = vmatpush.msra.mxu0 %v54
    %74 = vmatpush.msra.mxu0 %v53
    %75 = vmatpush.msra.mxu0 %v52
    %76 = vmatmul.f32.gmra.mxu0 %v58
    %v77 = vpop.f32.mrf.mxu0
    %v78 = vadd.f32 0.0, %v77
    %79 = vdwg.mxu0
    %v80 = vadd.f32 %v51, %v78
    %81 = vst [vmem:[#allocation2] sm:$0xff] %v80
    // Predicated region
    $region26: #{tpu_custom_call.1} parent=1 // pred_check
      %p82 = pneg %p45
    $region27: #{tpu_custom_call.1} parent=1 // pred_check_branch
      %84 = sbr.rel (%p82) target = $region29
    $region28: #{tpu_custom_call.1} parent=1 // pred_region
      %v85 = vld [vmem:[#allocation2] sm:$0xff]
      %v86 = vld [vmem:[%s2] sm:$0x1]
      %v88 = vperm.slane %v86, 0
      %v90 = vadd.f32 %v85, %v88
      %v91 = vmax.f32 %v90, 0.0
      %92 = vst [vmem:[#allocation8] sm:$0xff] %v91
    $region29: #{tpu_custom_call.1} parent=1 // pred_fallthru
      _
    // Predicated region
    $region30: #{tpu_custom_call.1} parent=1 // pred_check
      _
    $region31: #{tpu_custom_call.1} parent=1 // pred_check_branch
      %94 = sbr.rel (0) target = $region33
    $region32: #{tpu_custom_call.1} parent=1 // pred_region
      %96 = vsyncadd [#allocation5], 0
      %s98 = sshll.u32 [#allocation8], 4
      %s99 = int_to_ptr.vmem [resolvable:$true] %s98
      %s100 = sshll.u32 %s3, 4
      %s101 = int_to_ptr.hbm [resolvable:$true] %s100
      %103 = dma.vmem_to_hbm [thread:$0]  %s99, 128, %s101, [#allocation5]
    $region33: #{tpu_custom_call.1} parent=1 // pred_fallthru
      _
    // Predicated region
    $region34: #{tpu_custom_call.1} parent=1 // pred_check
      _
    $region35: #{tpu_custom_call.1} parent=1 // pred_check_branch
      %105 = sbr.rel (0) target = $region37
    $region36: #{tpu_custom_call.1} parent=1 // pred_region
      %107 = dma.done [#allocation5], 128
    $region37: #{tpu_custom_call.1} parent=1 // pred_fallthru
      _
    %108 = vsyncpa [#allocation4], 1
    %109 = vsyncpa [#allocation7], 1
    %110 = vsyncpa [#allocation5], 1

</llo_original>
